<compile_context>
chip_gen: v6e
topology: v6e:2x2x1
jax: 0.10.0
libtpu: 0.0.40
codegen_flags: <defaults>
</compile_context>

<pallas_src>
import functools

import jax
import jax.numpy as jnp
from jax.experimental import pallas as pl
from jax.experimental.pallas import tpu as pltpu


_LANE = 128      # lane granule (last dim)
_SUBLANE = 16    # sublane granule used for bf16 row tiles


def _round_up(x, m):
    return ((x + m - 1) // m) * m


def _pick_row_tile(n, target):
    """Largest divisor of n that is <= target and a multiple of the sublane
    granule (16 preferred for bf16 blocks, then 8).  Falls back to the full
    extent, which is always a legal block shape."""
    if n <= target:
        return n
    for granule in (16, 8):
        t = (target // granule) * granule
        while t >= granule:
            if n % t == 0:
                return t
            t -= granule
    # TODO(synk): pad/mask L for awkward (prime-ish) sequence lengths instead
    # of falling back to a full-extent block.
    return n


def _stage1_vmem_bytes(tn, E, Hp, emb_itemsize):
    ins = 2 * tn * E * emb_itemsize + 2 * E * 2 * Hp * 2 + 2 * 2 * Hp * 4
    outs = 2 * 2 * tn * Hp * 2
    temps = tn * E * 2 + tn * 2 * Hp * 4
    return ins + outs + temps


def _stage2_vmem_bytes(tli, L, Hp, O, out_itemsize):
    # Conservative: counts the resident weights as double-buffered even when
    # single-buffering (pl.Buffered(1)) succeeds.
    weights = 2 * ((Hp * O * Hp + Hp * O + O * Hp) * 2 + O * 4)
    acts = 2 * tli * Hp * 2 + 2 * Hp * L * 2
    outs = 2 * O * tli * L * out_itemsize
    temps = tli * O * Hp * 2 + tli * L * 4 + O * L * 4 + tli * O * 4
    return weights + acts + outs + temps


# ---------------------------------------------------------------------------
# Kernel 1: fused dep/head projection  relu(x @ [Wd|Wh] + [bd|bh]),
#           tiled over tokens N = B*L.
# ---------------------------------------------------------------------------
def _proj_kernel(emb_ref, w_ref, b_ref, dep_ref, head_ref, *, hid):
    x = emb_ref[...].astype(w_ref.dtype)            # cast in-kernel (no HBM convert pass)
    y = jnp.dot(x, w_ref[...], preferred_element_type=jnp.float32) + b_ref[...]
    y = jnp.maximum(y, 0.0)
    dep_ref[...] = y[:, :hid].astype(dep_ref.dtype)
    head_ref[...] = y[:, hid:].astype(head_ref.dtype)


# ---------------------------------------------------------------------------
# Kernel 2: pairwise biaffine, tiled over (batch, dep-row tile).
# ---------------------------------------------------------------------------
def _biaffine_kernel(dep_ref, headT_ref, w2_ref, w_h1_ref, w_1h_ref, c_ref,
                     out_ref, *, num_labels, hid):
    # dep_ref  : [1, TLI, Hp] bf16  (dep rows i of this tile)
    # headT_ref: [1, Hp, L]   bf16  (head of this batch, pre-transposed)
    # w2_ref   : [Hp, O*Hp]   bf16  (W2[p, o*Hp+q] = W[p, q, o])
    # w_h1_ref : [Hp, O]      bf16  (W[:Hd, Hd, :]   -> dep-side ones term)
    # w_1h_ref : [O, Hp]      bf16  (W[Hd, :Hd, :].T -> head-side ones term)
    # c_ref    : [1, O]       f32   (W[Hd, Hd, :] + bias)
    # out_ref  : [1, O, TLI, L]     (lane-dense along L)
    d = dep_ref[0]                                                  # [TLI, Hp]
    hT = headT_ref[0]                                               # [Hp, L]

    # dep-side ones term + constant (broadcast over j): [TLI, O]
    rb = jnp.dot(d, w_h1_ref[...], preferred_element_type=jnp.float32) + c_ref[...]
    # head-side ones term, already [O, L] (j along lanes)
    cb = jnp.dot(w_1h_ref[...], hT, preferred_element_type=jnp.float32)
    # Batched first contraction over p for ALL labels at once: [TLI, O*Hp].
    # MXU accumulates in f32 internally; bf16 result feeds the second matmul.
    t_all = jnp.dot(d, w2_ref[...], preferred_element_type=jnp.bfloat16)

    # TODO(synk): switch to lax.fori_loop over labels if num_labels grows
    # beyond ~8 (static unroll is fine for the small cue label set).
    for o in range(num_labels):
        t_o = t_all[:, o * hid:(o + 1) * hid]                       # lane-aligned slice
        s = jnp.dot(t_o, hT, preferred_element_type=jnp.float32)    # [TLI, L]
        out_ref[0, o, :, :] = (s + rb[:, o:o + 1] + cb[o:o + 1, :]).astype(out_ref.dtype)


# ---------------------------------------------------------------------------
# Wrapper
# ---------------------------------------------------------------------------
def biaffine_classifier(emb, params, *, tile_n=512, tile_li=256,
                        mxu_dtype=jnp.bfloat16, logits_dtype=jnp.float32,
                        out_layout="BLLO", vmem_budget_bytes=40 * 2**20):
    """emb: [B, L, E] sequence_output.

    Returns cue logits in the module layout [B, L, L, O] (out_layout="BLLO").
    Pass out_layout="BOLL" to keep the kernel-native lane-dense [B, O, L, L]
    layout and skip the final HBM relayout (read logits over axis=1), and
    logits_dtype=jnp.bfloat16 to halve the dominant HBM write when the
    consumer tolerates bf16 logits.
    """
    if out_layout not in ("BLLO", "BOLL"):
        raise ValueError(f"unknown out_layout: {out_layout}")
    B, L, E = emb.shape
    Hd = params["wd"].shape[1]
    O = params["b_bilin"].shape[-1]
    N = B * L
    Hp = _round_up(Hd, _LANE)       # zero-padded hidden dim -> lane-aligned slices
    out_itemsize = jnp.dtype(logits_dtype).itemsize
    emb_itemsize = jnp.dtype(emb.dtype).itemsize

    # --- parameter prep (tiny; cache these in a real model) --------------------
    pad_h = Hp - Hd
    wd = jnp.pad(params["wd"], ((0, 0), (0, pad_h)))
    wh = jnp.pad(params["wh"], ((0, 0), (0, pad_h)))
    w_cat = jnp.concatenate([wd, wh], axis=1).astype(mxu_dtype)             # [E, 2Hp]
    bd = jnp.pad(params["bd"].reshape(1, Hd), ((0, 0), (0, pad_h)))
    bh = jnp.pad(params["bh"].reshape(1, Hd), ((0, 0), (0, pad_h)))
    b_cat = jnp.concatenate([bd, bh], axis=1).astype(jnp.float32)           # [1, 2Hp]

    W = params["w_bilin"]                                                    # [Hd+1, Hd+1, O]
    # W2[p, o*Hp + q] = W[p, q, o]  (batched per-label first matmul)
    w2 = jnp.transpose(W[:Hd, :Hd, :], (0, 2, 1))                            # [Hd, O, Hd]
    w2 = jnp.pad(w2, ((0, pad_h), (0, 0), (0, pad_h)))
    w2 = w2.reshape(Hp, O * Hp).astype(mxu_dtype)                            # [Hp, O*Hp]
    w_h1 = jnp.pad(W[:Hd, Hd, :], ((0, pad_h), (0, 0))).astype(mxu_dtype)    # [Hp, O]
    w_1h = jnp.pad(W[Hd, :Hd, :].T, ((0, 0), (0, pad_h))).astype(mxu_dtype)  # [O, Hp]
    const = (W[Hd, Hd, :] + params["b_bilin"]).reshape(1, O).astype(jnp.float32)

    # --- stage 1: fused dep/head projection, tiled over tokens -----------------
    if N <= tile_n:
        tn = N                                     # single full-extent block
    else:
        tn = max(_SUBLANE, (tile_n // _SUBLANE) * _SUBLANE)
        while (tn > _SUBLANE and
               _stage1_vmem_bytes(tn, E, Hp, emb_itemsize) > vmem_budget_bytes):
            tn = max(_SUBLANE, ((tn // 2) // _SUBLANE) * _SUBLANE)
    N_pad = _round_up(N, tn)
    emb2 = emb.reshape(N, E)
    if N_pad != N:
        emb2 = jnp.pad(emb2, ((0, N_pad - N), (0, 0)))

    vmem1 = int(min(max(2 * _stage1_vmem_bytes(tn, E, Hp, emb_itemsize),
                        32 * 2**20), 100 * 2**20))
    dep_flat, head_flat = pl.pallas_call(
        functools.partial(_proj_kernel, hid=Hp),
        out_shape=(jax.ShapeDtypeStruct((N_pad, Hp), mxu_dtype),
                   jax.ShapeDtypeStruct((N_pad, Hp), mxu_dtype)),
        grid=(N_pad // tn,),
        in_specs=[
            pl.BlockSpec((tn, E), lambda i: (i, 0)),         # token tile (cast in-kernel)
            pl.BlockSpec((E, 2 * Hp), lambda i: (0, 0)),     # fused [Wd|Wh] (resident)
            pl.BlockSpec((1, 2 * Hp), lambda i: (0, 0)),     # fused [bd|bh]
        ],
        out_specs=(pl.BlockSpec((tn, Hp), lambda i: (i, 0)),
                   pl.BlockSpec((tn, Hp), lambda i: (i, 0))),
        compiler_params=pltpu.CompilerParams(
            dimension_semantics=("parallel",), vmem_limit_bytes=vmem1),
    )(emb2, w_cat, b_cat)

    dep3 = dep_flat[:N].reshape(B, L, Hp)
    # Pre-transpose head so both biaffine contractions are plain [M,K]x[K,N]
    # matmuls (no h^T materialization inside the label loop).  head is tiny
    # (N*Hp*2 bytes) compared to the [B, O, L, L] output stream.
    headT = jnp.swapaxes(head_flat[:N].reshape(B, L, Hp), 1, 2)              # [B, Hp, L]

    # --- stage 2: pairwise biaffine, tiled over (batch, dep-row tile) ----------
    tli = _pick_row_tile(L, tile_li)
    if B == 1 and L >= 16:
        # v7x megacore: make sure there are >= 2 grid steps to shard.
        tli = min(tli, _pick_row_tile(L, max(8, L // 2)))
    while (tli > 8 and
           _stage2_vmem_bytes(tli, L, Hp, O, out_itemsize) > vmem_budget_bytes):
        smaller = _pick_row_tile(L, tli // 2)
        if smaller >= tli:
            break
        tli = smaller
    vmem2 = int(min(max(int(1.5 * _stage2_vmem_bytes(tli, L, Hp, O, out_itemsize)),
                        32 * 2**20), 100 * 2**20))

    def _run_stage2(single_buffer_weights):
        # Constant-index-map weights do not need double buffering; single-
        # buffering them frees VMEM for a larger dep-row tile (v7x: 64 MiB).
        resident = {"pipeline_mode": pl.Buffered(1)} if single_buffer_weights else {}
        return pl.pallas_call(
            functools.partial(_biaffine_kernel, num_labels=O, hid=Hp),
            out_shape=jax.ShapeDtypeStruct((B, O, L, L), logits_dtype),
            grid=(B, L // tli),
            in_specs=[
                pl.BlockSpec((1, tli, Hp), lambda b, it: (b, it, 0)),          # dep tile
                pl.BlockSpec((1, Hp, L), lambda b, it: (b, 0, 0)),             # head^T
                pl.BlockSpec((Hp, O * Hp), lambda b, it: (0, 0), **resident),  # W2
                pl.BlockSpec((Hp, O), lambda b, it: (0, 0), **resident),       # W_h1
                pl.BlockSpec((O, Hp), lambda b, it: (0, 0), **resident),       # W_1h^T
                pl.BlockSpec((1, O), lambda b, it: (0, 0), **resident),        # W_11+bias
            ],
            out_specs=pl.BlockSpec((1, O, tli, L), lambda b, it: (b, 0, it, 0)),
            compiler_params=pltpu.CompilerParams(
                dimension_semantics=("parallel", "parallel"),
                vmem_limit_bytes=vmem2),
        )(dep3, headT, w2, w_h1, w_1h, const)

    try:
        out = _run_stage2(True)
    except Exception:
        # pipeline_mode / pl.Buffered not supported on this JAX version.
        out = _run_stage2(False)

    if out_layout == "BOLL":
        return out                     # lane-dense, no HBM relayout
    # Module layout [B, L, L, O]; prefer out_layout="BOLL" when the consumer
    # can read logits over axis=1 (this transpose re-streams the largest tensor).
    return jnp.transpose(out, (0, 2, 3, 1))


# ---------------------------------------------------------------------------
# Parameters & pure-JAX reference
# ---------------------------------------------------------------------------
def init_params(key, emb_dim, hid_dim, num_labels):
    ks = jax.random.split(key, 6)
    s = 1.0 / jnp.sqrt(emb_dim)
    wd = jax.random.uniform(ks[0], (emb_dim, hid_dim), jnp.float32, -s, s)
    bd = jax.random.uniform(ks[1], (1, hid_dim), jnp.float32, -s, s)
    wh = jax.random.uniform(ks[2], (emb_dim, hid_dim), jnp.float32, -s, s)
    bh = jax.random.uniform(ks[3], (1, hid_dim), jnp.float32, -s, s)
    # PyTorch initializes the bilinear weight/bias to zeros (learned); use
    # small random values here so the numerical check is meaningful.
    sb = 1.0 / hid_dim
    w_bilin = jax.random.uniform(ks[4], (hid_dim + 1, hid_dim + 1, num_labels),
                                 jnp.float32, -sb, sb)
    b_bilin = jax.random.uniform(ks[5], (num_labels,), jnp.float32, -sb, sb)
    return dict(wd=wd, bd=bd, wh=wh, bh=bh, w_bilin=w_bilin, b_bilin=b_bilin)


def _reference(emb, p):
    dep = jax.nn.relu(emb @ p["wd"] + p["bd"][0])
    head = jax.nn.relu(emb @ p["wh"] + p["bh"][0])
    ones = jnp.ones(dep.shape[:-1] + (1,), dep.dtype)
    d1 = jnp.concatenate([dep, ones], axis=-1)
    h1 = jnp.concatenate([head, ones], axis=-1)
    out = jnp.einsum("bip,pqo,bjq->bijo", d1, p["w_bilin"], h1)
    return out + p["b_bilin"]


if __name__ == "__main__":
    B, L, E, Hd, O = 2, 32, 32, 32, 4   # batch, seq, hidden_size, biaffine hid, labels
    key = jax.random.PRNGKey(0)
    kp, ke = jax.random.split(key)

    params = init_params(kp, E, Hd, O)
    embedding = jax.random.normal(ke, (B, L, E), jnp.float32)  # stands in for BERT output

    # Small tiles so the demo exercises multi-step grids on both stages.
    out = biaffine_classifier(embedding, params, tile_n=32, tile_li=16)
    out = jax.block_until_ready(out)
    assert out.shape == (B, L, L, O)

    # Lane-dense fast path: skips the final relayout (consumer reads axis=1).
    out_fast = biaffine_classifier(embedding, params, tile_n=32, tile_li=16,
                                   out_layout="BOLL")
    out_fast = jax.block_until_ready(out_fast)
    assert out_fast.shape == (B, O, L, L)

    ref = _reference(embedding, params)
    err1 = float(jnp.max(jnp.abs(out - ref)))
    err2 = float(jnp.max(jnp.abs(out_fast - jnp.transpose(ref, (0, 3, 1, 2)))))
    # bf16 MXU inputs with f32 accumulation -> relaxed tolerance.
    assert err1 < 2e-2, f"max abs error (BLLO) {err1}"
    assert err2 < 2e-2, f"max abs error (BOLL) {err2}"

    print("KERNEL_OK")
</pallas_src>

<mosaic_0001>
module attributes {stable_mosaic.version = 11 : i64} {
  func.func @_proj_kernel(%arg0: i32, %arg1: memref<32x32xf32, #tpu.memory_space<vmem>>, %arg2: memref<32x256xbf16, #tpu.memory_space<vmem>>, %arg3: memref<1x256xf32, #tpu.memory_space<vmem>>, %arg4: memref<32x128xbf16, #tpu.memory_space<vmem>>, %arg5: memref<32x128xbf16, #tpu.memory_space<vmem>>) attributes {dimension_semantics = [#tpu.dimension_semantics<parallel>], iteration_bounds = array<i64: 2>, scalar_prefetch = 0 : i64, scratch_operands = 0 : i64, tpu.core_type = #tpu.core_type<tc>, window_params = [{transform_indices = @transform_0, window_bounds = array<i64: 32, 32>}, {pipeline_mode = #tpu.pipeline_mode<synchronous>, transform_indices = @transform_1, window_bounds = array<i64: 32, 256>}, {pipeline_mode = #tpu.pipeline_mode<synchronous>, transform_indices = @transform_2, window_bounds = array<i64: 1, 256>}, {transform_indices = @transform_3, window_bounds = array<i64: 32, 128>}, {transform_indices = @transform_4, window_bounds = array<i64: 32, 128>}]} {
    %c0 = arith.constant 0 : index
    %c0_0 = arith.constant 0 : index
    %0 = vector.load %arg1[%c0, %c0_0] : memref<32x32xf32, #tpu.memory_space<vmem>>, vector<32x32xf32>
    %1 = arith.truncf %0 : vector<32x32xf32> to vector<32x32xbf16>
    %c0_1 = arith.constant 0 : index
    %c0_2 = arith.constant 0 : index
    %2 = vector.load %arg2[%c0_1, %c0_2] : memref<32x256xbf16, #tpu.memory_space<vmem>>, vector<32x256xbf16>
    %cst = arith.constant dense<0.000000e+00> : vector<32x256xf32>
    %3 = tpu.matmul %1, %2, %cst {dimension_numbers = #tpu.dot_dimension_numbers<[1], [0], [0], [1], [0, 0, 1, 1], [], []>} : vector<32x32xbf16>, vector<32x256xbf16>, vector<32x256xf32> -> vector<32x256xf32>
    %c0_3 = arith.constant 0 : index
    %c0_4 = arith.constant 0 : index
    %4 = vector.load %arg3[%c0_3, %c0_4] : memref<1x256xf32, #tpu.memory_space<vmem>>, vector<1x256xf32>
    %5 = vector.broadcast %4 : vector<1x256xf32> to vector<32x256xf32>
    %6 = arith.addf %3, %5 : vector<32x256xf32>
    %cst_5 = arith.constant 0.000000e+00 : f32
    %7 = vector.broadcast %cst_5 : f32 to vector<32x256xf32>
    %8 = arith.maximumf %6, %7 : vector<32x256xf32>
    %9 = vector.extract_strided_slice %8 {offsets = [0, 0], sizes = [32, 128], strides = [1, 1]} : vector<32x256xf32> to vector<32x128xf32>
    %10 = arith.truncf %9 : vector<32x128xf32> to vector<32x128xbf16>
    %c0_6 = arith.constant 0 : index
    %c0_7 = arith.constant 0 : index
    %11 = vector.load %arg4[%c0_6, %c0_7] : memref<32x128xbf16, #tpu.memory_space<vmem>>, vector<32x128xbf16>
    tpu.vector_store %arg4[%c0_6, %c0_7], %10 {strides = array<i32>} : memref<32x128xbf16, #tpu.memory_space<vmem>>, vector<32x128xbf16>,
    %12 = vector.extract_strided_slice %8 {offsets = [0, 128], sizes = [32, 128], strides = [1, 1]} : vector<32x256xf32> to vector<32x128xf32>
    %13 = arith.truncf %12 : vector<32x128xf32> to vector<32x128xbf16>
    %c0_8 = arith.constant 0 : index
    %c0_9 = arith.constant 0 : index
    %14 = vector.load %arg5[%c0_8, %c0_9] : memref<32x128xbf16, #tpu.memory_space<vmem>>, vector<32x128xbf16>
    tpu.vector_store %arg5[%c0_8, %c0_9], %13 {strides = array<i32>} : memref<32x128xbf16, #tpu.memory_space<vmem>>, vector<32x128xbf16>,
    return
  }
  func.func @transform_0(%arg0: i32) -> (i32, i32) {
    %c0_i32 = arith.constant 0 : i32
    %c0_i32_0 = arith.constant 0 : i32
    return %arg0, %c0_i32 : i32, i32
  }
  func.func @transform_1(%arg0: i32) -> (i32, i32) {
    %c0_i32 = arith.constant 0 : i32
    %c0_i32_0 = arith.constant 0 : i32
    %c0_i32_1 = arith.constant 0 : i32
    return %c0_i32, %c0_i32_0 : i32, i32
  }
  func.func @transform_2(%arg0: i32) -> (i32, i32) {
    %c0_i32 = arith.constant 0 : i32
    %c0_i32_0 = arith.constant 0 : i32
    %c0_i32_1 = arith.constant 0 : i32
    return %c0_i32, %c0_i32_0 : i32, i32
  }
  func.func @transform_3(%arg0: i32) -> (i32, i32) {
    %c0_i32 = arith.constant 0 : i32
    %c0_i32_0 = arith.constant 0 : i32
    return %arg0, %c0_i32 : i32, i32
  }
  func.func @transform_4(%arg0: i32) -> (i32, i32) {
    %c0_i32 = arith.constant 0 : i32
    %c0_i32_0 = arith.constant 0 : i32
    return %arg0, %c0_i32 : i32, i32
  }
}

</mosaic_0001>

<llo_original>
// kernel: tpu_custom_call.1
$region0: #{tpu_custom_call.1}
  #allocation0 [shape = 'u32[]', space=smem, size = 0x4, offset = 0x4, fixed_abs, tag = 'smem constant byte address 0x4 - core index']
  #allocation1 [shape = 'u32[144,128]{1,0:T(1,128)}', space=vmem, size = 0x12000, scoped, tag = 'internal scratch']
  %s0 = inlined_call_operand.vmem [shape: f32[64,32], index: 0, kind: input, shape index: {}]
  %s1 = inlined_call_operand.vmem [shape: bf16[32,256], index: 1, kind: input, shape index: {}]
  %s2 = inlined_call_operand.vmem [shape: f32[1,256], index: 2, kind: input, shape index: {}]
  %s3 = inlined_call_operand.hbm [shape: bf16[64,128], index: 3, kind: output, shape index: {0}]
  %s4 = inlined_call_operand.hbm [shape: bf16[64,128], index: 4, kind: output, shape index: {1}]
  %5 = xla_tuple %s3, %s4
  %s6 = sld [smem:[#allocation0]]
  $region53: #{tpu_custom_call.1} parent=0
    _
  %s8 = ssub.s32 1, %s6
  %s9 = scalar_select 0, %s8, %s6
  $region1: #{tpu_custom_call.1} parent=0
    #allocation2 [shape = 'u8[16384]{0}', space=vmem, size = 0x4000, scoped, tag = 'output window, operand 0']
    #allocation3 [shape = 's32[2]{0}', space=sflag, size = 0x8, scoped, tag = 'scoped memory for tpu_custom_call.1']
    #allocation4 [shape = 'u8[16384]{0}', space=vmem, size = 0x4000, scoped, tag = 'output window, operand 1']
    #allocation5 [shape = 's32[2]{0}', space=sflag, size = 0x8, scoped, tag = 'scoped memory for tpu_custom_call.1']
    %10 = vsyncpa [#allocation3], 0
    %s11 = scalar_lea.sflag [#allocation3], 1
    %12 = vsyncpa %s11, 0
    %13 = vsyncpa [#allocation5], 0
    %s14 = scalar_lea.sflag [#allocation5], 1
    %15 = vsyncpa %s14, 0
    loop: start=0, step=1, limit=4
    $region2: #{tpu_custom_call.1} parent=1 // loop_pre_header
      _
    $region3: #{tpu_custom_call.1} parent=1 // loop_header
      %s17 = sphi 0, %s21
      %p18 = scmp.ge.s32.totalorder %s17, 4
      %s27 = sphi 0, %s29
      %s30 = sphi 0, %s27
      %s31 = sphi 0, %s30
      %s47 = sphi 0, %s31
      %s51 = sphi 0, %s51
      %s53 = sphi 0, %s51
      %s54 = sphi 0, %s53
      %s68 = sphi 0, %s54
      %s72 = sphi 0, %s72
      %s74 = sphi 0, %s72
      %s75 = sphi 0, %s74
      %s89 = sphi 0, %s75
      %s95 = sphi 0, %s97
      %s98 = sphi 0, %s95
      %s99 = sphi 0, %s98
      %s115 = sphi 0, %s99
      %s121 = sphi 0, %s123
      %s124 = sphi 0, %s121
      %s125 = sphi 0, %s124
      %s141 = sphi 0, %s125
    $region4: #{tpu_custom_call.1} parent=1 // loop_header_branch
      %20 = sbr.rel (%p18) target = $region8
    $region5: #{tpu_custom_call.1} parent=1 // loop_body
      %s22 = ssub.s32 %s17, 1
      %s23 = ssub.s32 %s17, 2
      %s24 = sadd.s32 %s17, 1
      %s25 = ssub.s32 %s17, %s24
      %p26 = scmp.eq.s32.totalorder %s25, 0
      %s28 = sadd.s32 %s27, 1
      %s29 = scalar_select %p26, %s27, %s28
      %p32 = pneg %p26
      %p33 = scmp.eq.s32.totalorder %s17, 1
      %p34 = por %p32, %p33
      %p35 = scmp.ne.s32.totalorder %s27, %s30
      %p36 = scmp.eq.s32.totalorder %s17, 0
      %p37 = por %p35, %p36
      %p38 = scmp.ne.s32.totalorder %s27, %s30
      %p39 = scmp.eq.s32.totalorder %s22, 1
      %p40 = por %p38, %p39
      %p41 = scmp.ne.s32.totalorder %s30, %s31
      %p42 = scmp.eq.s32.totalorder %s22, 0
      %p43 = por %p41, %p42
      %p44 = scmp.ne.s32.totalorder %s30, %s31
      %p45 = scmp.eq.s32.totalorder %s23, 1
      %p46 = por %p44, %p45
      %p48 = scmp.ne.s32.totalorder %s31, %s47
      %p49 = scmp.eq.s32.totalorder %s23, 0
      %p50 = por %p48, %p49
      %s52 = sadd.s32 %s51, 1
      %p55 = scmp.eq.s32.totalorder %s17, 1
      %p56 = scmp.ne.s32.totalorder %s51, %s53
      %p57 = scmp.eq.s32.totalorder %s17, 0
      %p58 = por %p56, %p57
      %p59 = scmp.ne.s32.totalorder %s51, %s53
      %p60 = scmp.eq.s32.totalorder %s22, 1
      %p61 = por %p59, %p60
      %p62 = scmp.ne.s32.totalorder %s53, %s54
      %p63 = scmp.eq.s32.totalorder %s22, 0
      %p64 = por %p62, %p63
      %p65 = scmp.ne.s32.totalorder %s53, %s54
      %p66 = scmp.eq.s32.totalorder %s23, 1
      %p67 = por %p65, %p66
      %p69 = scmp.ne.s32.totalorder %s54, %s68
      %p70 = scmp.eq.s32.totalorder %s23, 0
      %p71 = por %p69, %p70
      %s73 = sadd.s32 %s72, 1
      %p76 = scmp.eq.s32.totalorder %s17, 1
      %p77 = scmp.ne.s32.totalorder %s72, %s74
      %p78 = scmp.eq.s32.totalorder %s17, 0
      %p79 = por %p77, %p78
      %p80 = scmp.ne.s32.totalorder %s72, %s74
      %p81 = scmp.eq.s32.totalorder %s22, 1
      %p82 = por %p80, %p81
      %p83 = scmp.ne.s32.totalorder %s74, %s75
      %p84 = scmp.eq.s32.totalorder %s22, 0
      %p85 = por %p83, %p84
      %p86 = scmp.ne.s32.totalorder %s74, %s75
      %p87 = scmp.eq.s32.totalorder %s23, 1
      %p88 = por %p86, %p87
      %p90 = scmp.ne.s32.totalorder %s75, %s89
      %p91 = scmp.eq.s32.totalorder %s23, 0
      %p92 = por %p90, %p91
      %s93 = ssub.s32 %s17, %s24
      %p94 = scmp.eq.s32.totalorder %s93, 0
      %s96 = sadd.s32 %s95, 1
      %s97 = scalar_select %p94, %s95, %s96
      %p100 = pneg %p94
      %p101 = scmp.eq.s32.totalorder %s17, 1
      %p102 = por %p100, %p101
      %p103 = scmp.ne.s32.totalorder %s95, %s98
      %p104 = scmp.eq.s32.totalorder %s17, 0
      %p105 = por %p103, %p104
      %p106 = scmp.ne.s32.totalorder %s95, %s98
      %p107 = scmp.eq.s32.totalorder %s22, 1
      %p108 = por %p106, %p107
      %p109 = scmp.ne.s32.totalorder %s98, %s99
      %p110 = scmp.eq.s32.totalorder %s22, 0
      %p111 = por %p109, %p110
      %p112 = scmp.ne.s32.totalorder %s98, %s99
      %p113 = scmp.eq.s32.totalorder %s23, 1
      %p114 = por %p112, %p113
      %p116 = scmp.ne.s32.totalorder %s99, %s115
      %p117 = scmp.eq.s32.totalorder %s23, 0
      %p118 = por %p116, %p117
      %s119 = ssub.s32 %s17, %s24
      %p120 = scmp.eq.s32.totalorder %s119, 0
      %s122 = sadd.s32 %s121, 1
      %s123 = scalar_select %p120, %s121, %s122
      %p126 = pneg %p120
      %p127 = scmp.eq.s32.totalorder %s17, 1
      %p128 = por %p126, %p127
      %p129 = scmp.ne.s32.totalorder %s121, %s124
      %p130 = scmp.eq.s32.totalorder %s17, 0
      %p131 = por %p129, %p130
      %p132 = scmp.ne.s32.totalorder %s121, %s124
      %p133 = scmp.eq.s32.totalorder %s22, 1
      %p134 = por %p132, %p133
      %p135 = scmp.ne.s32.totalorder %s124, %s125
      %p136 = scmp.eq.s32.totalorder %s22, 0
      %p137 = por %p135, %p136
      %p138 = scmp.ne.s32.totalorder %s124, %s125
      %p139 = scmp.eq.s32.totalorder %s23, 1
      %p140 = por %p138, %p139
      %p142 = scmp.ne.s32.totalorder %s125, %s141
      %p143 = scmp.eq.s32.totalorder %s23, 0
      %p144 = por %p142, %p143
      %p145 = scmp.le.s32.totalorder 1, %s17
      %p146 = scmp.lt.s32.totalorder %s17, 3
      %p147 = pnand %p145, %p146
      %p148 = pneg %p147
      // Predicated region
      $region9: #{tpu_custom_call.1} parent=5 // pred_check
        _
      $region10: #{tpu_custom_call.1} parent=5 // pred_check_branch
        %150 = sbr.rel (%p147) target = $region12
      $region11: #{tpu_custom_call.1} parent=5 // pred_region
        %s151 = ssub.s32 %s17, 1
        // Predicated region
        $region13: #{tpu_custom_call.1} parent=11 // pred_check
          %p152 = pneg %p64
        $region14: #{tpu_custom_call.1} parent=11 // pred_check_branch
          %154 = sbr.rel (%p152) target = $region16
        $region15: #{tpu_custom_call.1} parent=11 // pred_region
          _
        $region16: #{tpu_custom_call.1} parent=11 // pred_fallthru
          _
        // Predicated region
        $region17: #{tpu_custom_call.1} parent=11 // pred_check
          %p155 = pneg %p85
        $region18: #{tpu_custom_call.1} parent=11 // pred_check_branch
          %157 = sbr.rel (%p155) target = $region20
        $region19: #{tpu_custom_call.1} parent=11 // pred_region
          _
        $region20: #{tpu_custom_call.1} parent=11 // pred_fallthru
          _
      $region12: #{tpu_custom_call.1} parent=5 // pred_fallthru
        _
      %p158 = scmp.lt.s32.totalorder %s17, 2
      // Predicated region
      $region21: #{tpu_custom_call.1} parent=5 // pred_check
        %p159 = pneg %p158
      $region22: #{tpu_custom_call.1} parent=5 // pred_check_branch
        %161 = sbr.rel (%p159) target = $region24
      $region23: #{tpu_custom_call.1} parent=5 // pred_region
        // Predicated region
        $region25: #{tpu_custom_call.1} parent=23 // pred_check
          %p162 = pneg %p37
        $region26: #{tpu_custom_call.1} parent=23 // pred_check_branch
          %164 = sbr.rel (%p162) target = $region28
        $region27: #{tpu_custom_call.1} parent=23 // pred_region
          %s165 = smul.u32 4, %s17
          %p166 = scmp.lt.s32.totalorder %s165, 7
          %s167 = scalar_select %p166, %s165, 7
          %s168 = smul.addr %s167, 8
          %s169 = scalar_lea.vmem %s0, %s168
          %s170 = smul.u32 4, %s17
        $region28: #{tpu_custom_call.1} parent=23 // pred_fallthru
          _
      $region24: #{tpu_custom_call.1} parent=5 // pred_fallthru
        _
      %p171 = scmp.le.s32.totalorder 1, %s17
      %p172 = scmp.lt.s32.totalorder %s17, 3
      %p173 = pnand %p171, %p172
      %p174 = pneg %p173
      // Predicated region
      $region29: #{tpu_custom_call.1} parent=5 // pred_check
        _
      $region30: #{tpu_custom_call.1} parent=5 // pred_check_branch
        %176 = sbr.rel (%p173) target = $region32
      $region31: #{tpu_custom_call.1} parent=5 // pred_region
        %s177 = ssub.s32 %s17, 1
        %s178 = smul.u32 4, %s22
        %p179 = scmp.lt.s32.totalorder %s178, 7
        %s180 = scalar_select %p179, %s178, 7
        %s181 = smul.addr %s180, 8
        %s182 = scalar_lea.vmem %s0, %s181
        %p183 = pneg %p43
        %p184 = pneg %p40
        %p185 = pneg %p64
        %p186 = pneg %p61
        %p187 = pneg %p85
        %p188 = pneg %p82
        %p189 = pneg %p111
        %p190 = pneg %p108
        %s191 = sand.u32 %s98, 1
        %s192 = scalar_lea.sflag [#allocation3], %s191
        %s193 = sand.u32 %s98, 1
        %s194 = smul.addr %s193, 16
        %s195 = scalar_lea.vmem [#allocation2], %s194
        %p196 = pneg %p137
        %p197 = pneg %p134
        %s198 = sand.u32 %s124, 1
        %s199 = scalar_lea.sflag [#allocation5], %s198
        %s200 = sand.u32 %s124, 1
        %s201 = smul.addr %s200, 16
        %s202 = scalar_lea.vmem [#allocation4], %s201
        %s203 = smul.u32 4, %s22
        %p204 = scmp.lt.s32.totalorder %s203, 7
        %s205 = scalar_select %p204, %s203, 7
        %s206 = smul.addr %s205, 8
        %s207 = scalar_lea.vmem %s0, %s206
        %s208 = smul.u32 4, %s22
        %s209 = smul.u32 4, %s22
        %s210 = smul.u32 4, %s22
        %v212 = vld [vmem:[%s207] sm:$0xff]
        %v213 = vld [vmem:[%s207 + $0x8] sm:$0xff]
        %v214 = vld [vmem:[%s207 + $0x10] sm:$0xff]
        %v215 = vld [vmem:[%s207 + $0x18] sm:$0xff]
        %v216 = vpack.c.bf16 %v213, %v212
        %v217 = vpack.c.bf16 %v215, %v214
        %v218 = vld [vmem:[%s1] sm:$0xff]
        %v219 = vld [vmem:[%s1 + $0x8] sm:$0xff]
        %v220 = vld [vmem:[%s1 + $0x10] sm:$0xff]
        %v221 = vld [vmem:[%s1 + $0x18] sm:$0xff]
        %v222 = vld [vmem:[%s2] sm:$0x3]
        %v224 = vlaneseq
        %v225 = vshrl.u32 %v224, 7
        %v226 = vsub.s32 0, %v225
        %v227 = vrot.slane %v222, %v226
        %v228 = vlaneseq
        %v229 = vshrl.u32 %v228, 7
        %v230 = vsub.s32 1, %v229
        %v231 = vrot.slane %v222, %v230
        %v238 = vunpack.c.l.b16 %v218
        %v239 = vunpack.c.h.b16 %v218
        %v240 = vunpack.c.l.b16 %v219
        %v241 = vunpack.c.h.b16 %v219
        %v242 = vunpack.c.l.b16 %v220
        %v243 = vunpack.c.h.b16 %v220
        %v244 = vunpack.c.l.b16 %v221
        %v245 = vunpack.c.h.b16 %v221
        %v246 = vpack.c.b16 %v240, %v238
        %v247 = vpack.c.b16 %v241, %v239
        %v248 = vpack.c.b16 %v244, %v242
        %v249 = vpack.c.b16 %v245, %v243
        %vm254 = vcmask 261120
        %v256 = vsel %vm254, %v216, 0
        %v259 = vsel %vm254, %v217, 0
        %261 = vmatprep.subr.bf16.mxu0 0
        %262 = vmatpush1.bf16.msra.mxu0 0
        %263 = vmatprep.subr.bf16.mxu0 0
        %264 = vmatpush1.bf16.msra.mxu0 0
        %265 = vmatprep.subr.bf16.mxu0 0
        %266 = vmatpush1.bf16.msra.mxu0 0
        %267 = vmatprep.subr.bf16.mxu0 0
        %268 = vmatpush1.bf16.msra.mxu0 0
        %269 = vmatprep.subr.bf16.mxu0 0
        %270 = vmatpush1.bf16.msra.mxu0 0
        %271 = vmatprep.subr.bf16.mxu0 0
        %272 = vmatpush1.bf16.msra.mxu0 0
        %273 = vmatprep.subr.bf16.mxu0 %v249
        %274 = vmatpush1.bf16.msra.mxu0 %v248
        %275 = vmatprep.subr.bf16.mxu0 %v247
        %276 = vmatpush1.bf16.msra.mxu0 %v246
        %277 = vmatprep.subr.bf16.mxu0 0
        %278 = vmatpush2.bf16.msra.mxu0 0
        %279 = vmatprep.subr.bf16.mxu0 0
        %280 = vmatpush2.bf16.msra.mxu0 0
        %281 = vmatprep.subr.bf16.mxu0 0
        %282 = vmatpush2.bf16.msra.mxu0 0
        %283 = vmatprep.subr.bf16.mxu0 0
        %284 = vmatpush2.bf16.msra.mxu0 0
        %285 = vmatprep.subr.bf16.mxu0 0
        %286 = vmatpush2.bf16.msra.mxu0 0
        %287 = vmatprep.subr.bf16.mxu0 0
        %288 = vmatpush2.bf16.msra.mxu0 0
        %289 = vmatprep.subr.bf16.mxu0 0
        %290 = vmatpush2.bf16.msra.mxu0 0
        %291 = vmatprep.subr.bf16.mxu0 0
        %292 = vmatpush2.bf16.msra.mxu0 0
        %293 = vmatprep.mubr.bf16.mxu0 0
        %294 = vmatmul.mubr.bf16.gmra.mxu0 %v256
        %v295 = vpop.f32.mrf.mxu0
        %v296 = vadd.f32 %v227, %v295
        %v297 = vpop.f32.mrf.mxu0
        %v298 = vadd.f32 %v231, %v297
        %v299 = vpop.f32.mrf.mxu0
        %v300 = vadd.f32 %v227, %v299
        %v301 = vpop.f32.mrf.mxu0
        %v302 = vadd.f32 %v231, %v301
        %303 = vmatprep.mubr.bf16.mxu0 0
        %304 = vmatmul.mubr.bf16.gmra.mxu0 %v259
        %v305 = vpop.f32.mrf.mxu0
        %v306 = vadd.f32 %v227, %v305
        %v307 = vpop.f32.mrf.mxu0
        %v308 = vadd.f32 %v231, %v307
        %v309 = vpop.f32.mrf.mxu0
        %v310 = vadd.f32 %v227, %v309
        %v311 = vpop.f32.mrf.mxu0
        %v312 = vadd.f32 %v231, %v311
        %313 = vdwg.mxu0
        %v314 = vmax.f32 %v296, 0.0
        %v315 = vmax.f32 %v298, 0.0
        %v316 = vmax.f32 %v300, 0.0
        %v317 = vmax.f32 %v302, 0.0
        %v318 = vmax.f32 %v306, 0.0
        %v319 = vmax.f32 %v308, 0.0
        %v320 = vmax.f32 %v310, 0.0
        %v321 = vmax.f32 %v312, 0.0
        %v322 = vpack.c.bf16 %v316, %v314
        %v323 = vpack.c.bf16 %v320, %v318
        %v326 = vunpack.c.l.b16 %v322
        %v327 = vunpack.c.h.b16 %v322
        %v328 = vunpack.c.l.b16 %v323
        %v329 = vunpack.c.h.b16 %v323
        %v330 = vpack.c.b16 %v326, %v326
        %v331 = vpack.c.b16 %v327, %v327
        %v332 = vpack.c.b16 %v328, %v328
        %v333 = vpack.c.b16 %v329, %v329
        %338 = vst [vmem:[%s195] sm:$0xf] %v330
        %339 = vst [vmem:[%s195 + $0x4] sm:$0xf] %v331
        %340 = vst [vmem:[%s195 + $0x8] sm:$0xf] %v332
        %341 = vst [vmem:[%s195 + $0xc] sm:$0xf] %v333
        %v342 = vpack.c.bf16 %v317, %v315
        %v343 = vpack.c.bf16 %v321, %v319
        %v346 = vunpack.c.l.b16 %v342
        %v347 = vunpack.c.h.b16 %v342
        %v348 = vunpack.c.l.b16 %v343
        %v349 = vunpack.c.h.b16 %v343
        %v350 = vpack.c.b16 %v346, %v346
        %v351 = vpack.c.b16 %v347, %v347
        %v352 = vpack.c.b16 %v348, %v348
        %v353 = vpack.c.b16 %v349, %v349
        %358 = vst [vmem:[%s202] sm:$0xf] %v350
        %359 = vst [vmem:[%s202 + $0x4] sm:$0xf] %v351
        %360 = vst [vmem:[%s202 + $0x8] sm:$0xf] %v352
        %361 = vst [vmem:[%s202 + $0xc] sm:$0xf] %v353
        %s362 = sand.u32 %s98, 1
        %s363 = scalar_lea.sflag [#allocation3], %s362
        %s364 = sand.u32 %s98, 1
        %s365 = smul.addr %s364, 16
        %s366 = scalar_lea.vmem [#allocation2], %s365
        %s367 = sand.u32 %s124, 1
        %s368 = scalar_lea.sflag [#allocation5], %s367
        %s369 = sand.u32 %s124, 1
        %s370 = smul.addr %s369, 16
        %s371 = scalar_lea.vmem [#allocation4], %s370
        // Predicated region
        $region33: #{tpu_custom_call.1} parent=31 // pred_check
          %p372 = pneg %p108
        $region34: #{tpu_custom_call.1} parent=31 // pred_check_branch
          %374 = sbr.rel (%p372) target = $region36
        $region35: #{tpu_custom_call.1} parent=31 // pred_region
          %s375 = smul.u32 4, %s22
          %s377 = ssub.s32 256, 256
          %378 = vsyncadd %s363, %s377
          %s379 = smul.addr %s375, 64
          %s380 = scalar_lea.hbm %s3, %s379
          %s381 = sshll.u32 %s366, 4
          %s382 = int_to_ptr.vmem [resolvable:$true] %s381
          %387 = dma.vmem_to_hbm [thread:$0]  %s382, 256, %s380, %s363, 64, 64, 4
        $region36: #{tpu_custom_call.1} parent=31 // pred_fallthru
          _
        // Predicated region
        $region37: #{tpu_custom_call.1} parent=31 // pred_check
          %p388 = pneg %p134
        $region38: #{tpu_custom_call.1} parent=31 // pred_check_branch
          %390 = sbr.rel (%p388) target = $region40
        $region39: #{tpu_custom_call.1} parent=31 // pred_region
          %s391 = smul.u32 4, %s22
          %s393 = ssub.s32 256, 256
          %394 = vsyncadd %s368, %s393
          %s395 = smul.addr %s391, 64
          %s396 = scalar_lea.hbm %s4, %s395
          %s397 = sshll.u32 %s371, 4
          %s398 = int_to_ptr.vmem [resolvable:$true] %s397
          %403 = dma.vmem_to_hbm [thread:$0]  %s398, 256, %s396, %s368, 64, 64, 4
        $region40: #{tpu_custom_call.1} parent=31 // pred_fallthru
          _
      $region32: #{tpu_custom_call.1} parent=5 // pred_fallthru
        _
      %p404 = scmp.le.s32.totalorder 2, %s17
      // Predicated region
      $region41: #{tpu_custom_call.1} parent=5 // pred_check
        %p405 = pneg %p404
      $region42: #{tpu_custom_call.1} parent=5 // pred_check_branch
        %407 = sbr.rel (%p405) target = $region44
      $region43: #{tpu_custom_call.1} parent=5 // pred_region
        %s408 = ssub.s32 %s17, 2
        // Predicated region
        $region45: #{tpu_custom_call.1} parent=43 // pred_check
          %p409 = pneg %p114
        $region46: #{tpu_custom_call.1} parent=43 // pred_check_branch
          %411 = sbr.rel (%p409) target = $region48
        $region47: #{tpu_custom_call.1} parent=43 // pred_region
          %s412 = sand.u32 %s99, 1
          %s413 = scalar_lea.sflag [#allocation3], %s412
          %s414 = sand.u32 %s99, 1
          %s415 = smul.addr %s414, 16
          %s416 = scalar_lea.vmem [#allocation2], %s415
          %417 = dma.done %s413, 256
        $region48: #{tpu_custom_call.1} parent=43 // pred_fallthru
          _
        // Predicated region
        $region49: #{tpu_custom_call.1} parent=43 // pred_check
          %p418 = pneg %p140
        $region50: #{tpu_custom_call.1} parent=43 // pred_check_branch
          %420 = sbr.rel (%p418) target = $region52
        $region51: #{tpu_custom_call.1} parent=43 // pred_region
          %s421 = sand.u32 %s125, 1
          %s422 = scalar_lea.sflag [#allocation5], %s421
          %s423 = sand.u32 %s125, 1
          %s424 = smul.addr %s423, 16
          %s425 = scalar_lea.vmem [#allocation4], %s424
          %426 = dma.done %s422, 256
        $region52: #{tpu_custom_call.1} parent=43 // pred_fallthru
          _
      $region44: #{tpu_custom_call.1} parent=5 // pred_fallthru
        _
    $region6: #{tpu_custom_call.1} parent=1 // loop_footer
      %s21 = sadd.s32 1, %s17
    $region7: #{tpu_custom_call.1} parent=1 // loop_footer_branch
      %16 = sbr.rel target = $region3
    $region8: #{tpu_custom_call.1} parent=1 // loop_exit
      _
    %427 = vsyncpa [#allocation3], 1
    %s428 = scalar_lea.sflag [#allocation3], 1
    %429 = vsyncpa %s428, 1
    %430 = vsyncpa [#allocation5], 1
    %s431 = scalar_lea.sflag [#allocation5], 1
    %432 = vsyncpa %s431, 1

</llo_original>
